<compile_context>
chip_gen: v5e
topology: v5e:2x2
jax: 0.10.0
libtpu: 0.0.40
codegen_flags: <defaults>
</compile_context>

<pallas_src>
import functools

import numpy as np
import jax
import jax.numpy as jnp
from jax.experimental import pallas as pl
from jax.experimental.pallas import tpu as pltpu


def _round_up(x, m):
    return ((x + m - 1) // m) * m


def _focal_loss_kernel(geo_ref, cls_ref, reg_ref, ann_ref, out_ref,
                       *, alpha, gamma, num_classes, num_anchors, tile_a):
    f32 = jnp.float32
    t = pl.program_id(1)

    geo = geo_ref[...]               # (16, TA) precomputed anchor geometry (lane-dense A)
    cls = cls_ref[0].astype(f32)     # (C_pad, TA)
    reg = reg_ref[0]                 # (4, TA)
    ann = ann_ref[0]                 # (M_pad, 8) lanes: x1,y1,x2,y2,class,area,0,0

    TA = geo.shape[1]
    C_pad = cls.shape[0]
    M_pad = ann.shape[0]

    ax1 = geo[0]
    ay1 = geo[1]
    ax2 = geo[2]
    ay2 = geo[3]
    aw = geo[4]
    ah = geo[5]
    acx = geo[6]
    acy = geo[7]
    inv_aw = geo[8]
    inv_ah = geo[9]
    area_a = geo[10]
    log_aw = geo[11]
    log_ah = geo[12]

    # annotation columns, already on the sublane axis (no lane->sublane relayout)
    bx1 = ann[:, 0:1]                # (M_pad, 1)
    by1 = ann[:, 1:2]
    bx2 = ann[:, 2:3]
    by2 = ann[:, 3:4]
    bcls = ann[:, 4:5]
    area_b = ann[:, 5:6]             # precomputed; 0 for invalid / padded rows

    # torch.clamp(c, 1e-4, 1 - 1e-4)
    cls = jnp.clip(cls, 0.0001, 1.0 - 0.0001)

    # ---- IoU between this anchor tile and all (padded) annotations: (M_pad, TA) ----
    # Invalid / padded annotation rows were zeroed in the wrapper (zero-area boxes),
    # so their IoU is exactly 0 and they never beat a valid match.
    iw = jnp.maximum(jnp.minimum(ax2[None, :], bx2) - jnp.maximum(ax1[None, :], bx1), 0.0)
    ih = jnp.maximum(jnp.minimum(ay2[None, :], by2) - jnp.maximum(ay1[None, :], by1), 0.0)
    inter = iw * ih
    ua = jnp.maximum(area_a[None, :] + area_b - inter, 1e-8)
    inv_ua = pl.reciprocal(ua, approx=True)
    inv_ua = inv_ua * (2.0 - ua * inv_ua)          # one Newton step -> near-exact divide
    iou = inter * inv_ua                           # (M_pad, TA)

    iou_max = jnp.max(iou, axis=0)                                  # (TA,)
    m_iota = jax.lax.broadcasted_iota(jnp.int32, (M_pad, TA), 0)
    is_max = iou >= iou_max[None, :]
    argmax = jnp.min(jnp.where(is_max, m_iota, M_pad), axis=0)      # first max index
    onehot = jnp.where(m_iota == argmax[None, :], 1.0, 0.0)         # (M_pad, TA)

    # ---- exact VPU select-sum gather of the assigned annotation (M_pad is small) ----
    def sel(col):                        # col: (M_pad, 1) -> (TA,)
        return jnp.sum(onehot * col, axis=0)

    gx1 = sel(bx1)
    gy1 = sel(by1)
    gx2 = sel(bx2)
    gy2 = sel(by2)
    gcls = jnp.round(sel(bcls)).astype(jnp.int32)                   # like .long()

    # ---- positive / negative anchor masks (mask out padded anchors statically) ----
    if num_anchors % tile_a != 0:
        a_iota = jax.lax.broadcasted_iota(jnp.int32, (1, TA), 1)[0]
        anchor_valid = (t * tile_a + a_iota) < num_anchors          # (TA,)
        pos = jnp.logical_and(iou_max >= 0.5, anchor_valid)
        contrib = jnp.logical_and(jnp.logical_or(pos, iou_max < 0.4), anchor_valid)
    else:
        pos = iou_max >= 0.5
        contrib = jnp.logical_or(pos, iou_max < 0.4)

    pos_f = jnp.where(pos, 1.0, 0.0)
    num_pos = jnp.sum(pos_f)

    # ---- classification (focal) loss on (C_pad, TA) — no explicit targets tensor ----
    c_iota = jax.lax.broadcasted_iota(jnp.int32, (C_pad, TA), 0)
    is_one = jnp.logical_and(pos[None, :], c_iota == gcls[None, :])  # targets == 1
    mask = contrib[None, :]
    if C_pad > num_classes:
        mask = jnp.logical_and(mask, c_iota < num_classes)           # padded classes -> 0

    alpha_factor = jnp.where(is_one, alpha, 1.0 - alpha)
    fw = jnp.where(is_one, 1.0 - cls, cls)
    g = float(gamma)
    if g == 2.0:
        fw_pow = fw * fw
    elif g == float(int(g)) and 1.0 <= g <= 4.0:
        fw_pow = fw
        for _ in range(int(g) - 1):
            fw_pow = fw_pow * fw
    else:
        fw_pow = fw ** gamma
    # one log per element: select the argument, not the result (EUP)
    bce = -jnp.log(jnp.where(is_one, cls, 1.0 - cls))
    cls_sum = jnp.sum(jnp.where(mask, alpha_factor * fw_pow * bce, 0.0))

    # ---- regression (smooth L1) loss over positive anchors ----
    gw_raw = gx2 - gx1
    gh_raw = gy2 - gy1
    gcx = gx1 + 0.5 * gw_raw
    gcy = gy1 + 0.5 * gh_raw
    gw = jnp.maximum(gw_raw, 1.0)
    gh = jnp.maximum(gh_raw, 1.0)

    tdx = (gcx - acx) * inv_aw * 10.0          # == /aw /0.1
    tdy = (gcy - acy) * inv_ah * 10.0
    tdw = (jnp.log(gw) - log_aw) * 5.0         # == log(gw/aw)/0.2
    tdh = (jnp.log(gh) - log_ah) * 5.0

    def smooth_l1(d):
        d = jnp.abs(d)
        return jnp.where(d <= 1.0 / 9.0, 0.5 * 9.0 * d * d, d - 0.5 / 9.0)

    reg_sum = jnp.sum((smooth_l1(tdx - reg[0]) + smooth_l1(tdy - reg[1]) +
                       smooth_l1(tdw - reg[2]) + smooth_l1(tdh - reg[3])) * pos_f)

    # ---- lane-dense partial-sum output: lanes [0,1,2] = cls_sum, reg_sum, num_pos ----
    lane = jax.lax.broadcasted_iota(jnp.int32, (1, 1, 8, 128), 3)
    vals = jnp.where(lane == 0, cls_sum, 0.0)
    vals = jnp.where(lane == 1, reg_sum, vals)
    vals = jnp.where(lane == 2, num_pos, vals)
    out_ref[...] = vals.astype(out_ref.dtype)


def focal_loss_pallas(classifications, regressions, anchors, annotations,
                      alpha=0.25, gamma=2.0, block_a=2048, cls_in_bf16=False):
    f32 = jnp.float32
    B, A, C = classifications.shape
    M = annotations.shape[1]

    TA = min(_round_up(block_a, 128), _round_up(A, 128))
    A_pad = _round_up(A, TA)
    T = A_pad // TA
    C_pad = _round_up(C, 8)
    M_pad = _round_up(M, 8)          # sublane-only padding (was 128-lane padding)

    # ---- anchor geometry, precomputed once (hoisted out of the kernel), 16 sublanes ----
    anch = anchors[0].astype(f32)                                   # (A, 4)
    if A_pad > A:
        pad_box = jnp.tile(jnp.asarray([[0.0, 0.0, 1.0, 1.0]], f32), (A_pad - A, 1))
        anch = jnp.concatenate([anch, pad_box], axis=0)             # safe boxes for padding
    ax1, ay1, ax2, ay2 = anch[:, 0], anch[:, 1], anch[:, 2], anch[:, 3]
    aw = ax2 - ax1
    ah = ay2 - ay1
    acx = ax1 + 0.5 * aw
    acy = ay1 + 0.5 * ah
    inv_aw = 1.0 / aw
    inv_ah = 1.0 / ah
    area_a = aw * ah
    log_aw = jnp.log(aw)
    log_ah = jnp.log(ah)
    zeros = jnp.zeros_like(aw)
    anchor_geo = jnp.stack([ax1, ay1, ax2, ay2, aw, ah, acx, acy,
                            inv_aw, inv_ah, area_a, log_aw, log_ah,
                            zeros, zeros, zeros], axis=0)           # (16, A_pad)

    # ---- lane-dense (component-major) activations ----
    # Optional bf16 cast of the dominant tensor halves the transpose + kernel HBM traffic
    # (default off to keep bit-level parity with the f32 reference).
    cls_dtype = jnp.bfloat16 if cls_in_bf16 else f32
    cls_t = jnp.transpose(classifications.astype(cls_dtype), (0, 2, 1))   # (B, C, A)
    cls_t = jnp.pad(cls_t, ((0, 0), (0, C_pad - C), (0, A_pad - A)))
    reg_t = jnp.transpose(regressions.astype(f32), (0, 2, 1))             # (B, 4, A)
    reg_t = jnp.pad(reg_t, ((0, 0), (0, 0), (0, A_pad - A)))

    # ---- annotations: (B, M_pad, 8), M on the sublane axis ----
    # lanes: [x1, y1, x2, y2, class, area, 0, 0]; invalid rows (class == -1) get
    # zero-area boxes so their IoU with every anchor is exactly 0.
    ann = annotations.astype(f32)
    valid = ann[:, :, 4:5] != -1.0                                   # (B, M, 1)
    boxes = jnp.where(valid, ann[:, :, :4], 0.0)
    area_b = (boxes[:, :, 2] - boxes[:, :, 0]) * (boxes[:, :, 3] - boxes[:, :, 1])
    ann_p = jnp.concatenate([boxes, ann[:, :, 4:5], area_b[..., None],
                             jnp.zeros((B, M, 2), f32)], axis=2)     # (B, M, 8)
    if M_pad > M:
        pad_rows = jnp.zeros((B, M_pad - M, 8), f32).at[:, :, 4].set(-1.0)
        ann_p = jnp.concatenate([ann_p, pad_rows], axis=1)           # (B, M_pad, 8)

    kernel = functools.partial(_focal_loss_kernel,
                               alpha=float(alpha), gamma=float(gamma),
                               num_classes=C, num_anchors=A, tile_a=TA)

    out = pl.pallas_call(
        kernel,
        out_shape=jax.ShapeDtypeStruct((B, T, 8, 128), jnp.float32),
        grid=(B, T),
        in_specs=[
            pl.BlockSpec((16, TA), lambda b, t: (0, t)),              # anchor geometry
            pl.BlockSpec((1, C_pad, TA), lambda b, t: (b, 0, t)),     # classifications
            pl.BlockSpec((1, 4, TA), lambda b, t: (b, 0, t)),         # regressions
            pl.BlockSpec((1, M_pad, 8), lambda b, t: (b, 0, 0)),      # annotations
        ],
        out_specs=pl.BlockSpec((1, 1, 8, 128), lambda b, t: (b, t, 0, 0)),
        compiler_params=pltpu.CompilerParams(
            dimension_semantics=("parallel", "parallel"),
            vmem_limit_bytes=32 * 1024 * 1024),
    )(anchor_geo, cls_t, reg_t, ann_p)

    # ---- finalize per image in the wrapper (keeps both grid axes parallel) ----
    parts = out[:, :, 0, :3]                     # (B, T, 3) partial sums
    sums = jnp.sum(parts, axis=1)                # (B, 3): cls_sum, reg_sum, num_pos
    num_pos = sums[:, 2]
    cls_img = sums[:, 0] / jnp.maximum(num_pos, 1.0)
    reg_img = sums[:, 1] / jnp.maximum(4.0 * num_pos, 1.0)
    has_valid = jnp.any(annotations[:, :, 4] != -1.0, axis=1)
    cls_img = jnp.where(has_valid, cls_img, 0.0)
    reg_img = jnp.where(has_valid, reg_img, 0.0)
    return (jnp.mean(cls_img, keepdims=True),    # matches torch mean(dim=0, keepdim=True)
            jnp.mean(reg_img, keepdims=True))


# ----------------------- numpy reference (torch semantics) -----------------------
def _iou_np(a, b):
    area_b = (b[:, 2] - b[:, 0]) * (b[:, 3] - b[:, 1])
    iw = np.minimum(a[:, 2:3], b[None, :, 2]) - np.maximum(a[:, 0:1], b[None, :, 0])
    ih = np.minimum(a[:, 3:4], b[None, :, 3]) - np.maximum(a[:, 1:2], b[None, :, 1])
    iw = np.clip(iw, 0.0, None)
    ih = np.clip(ih, 0.0, None)
    area_a = ((a[:, 2] - a[:, 0]) * (a[:, 3] - a[:, 1]))[:, None]
    ua = np.clip(area_a + area_b[None, :] - iw * ih, 1e-8, None)
    return (iw * ih) / ua


def focal_loss_reference(classifications, regressions, anchors, annotations,
                         alpha=0.25, gamma=2.0):
    cls_all = np.asarray(classifications, np.float32)
    reg_all = np.asarray(regressions, np.float32)
    anch = np.asarray(anchors, np.float32)[0]
    ann_all = np.asarray(annotations, np.float32)
    B = cls_all.shape[0]
    aw = anch[:, 2] - anch[:, 0]
    ah = anch[:, 3] - anch[:, 1]
    acx = anch[:, 0] + 0.5 * aw
    acy = anch[:, 1] + 0.5 * ah
    cls_losses, reg_losses = [], []
    for b in range(B):
        bbox = ann_all[b]
        bbox = bbox[bbox[:, 4] != -1]
        if bbox.shape[0] == 0:
            cls_losses.append(0.0)
            reg_losses.append(0.0)
            continue
        c = np.clip(cls_all[b], 1e-4, 1.0 - 1e-4)
        iou = _iou_np(anch, bbox[:, :4])
        iou_max = iou.max(axis=1)
        iou_argmax = iou.argmax(axis=1)
        targets = -np.ones_like(c)
        targets[iou_max < 0.4, :] = 0.0
        pos = iou_max >= 0.5
        num_pos = pos.sum()
        assigned = bbox[iou_argmax]
        targets[pos, :] = 0.0
        targets[pos, assigned[pos, 4].astype(np.int64)] = 1.0
        af = np.where(targets == 1.0, alpha, 1.0 - alpha)
        fw = np.where(targets == 1.0, 1.0 - c, c)
        fw = af * fw ** gamma
        bce = -(targets * np.log(c) + (1.0 - targets) * np.log(1.0 - c))
        cl = np.where(targets != -1.0, fw * bce, 0.0)
        cls_losses.append(cl.sum() / max(float(num_pos), 1.0))
        if num_pos > 0:
            a_pi = assigned[pos]
            aw_p, ah_p, acx_p, acy_p = aw[pos], ah[pos], acx[pos], acy[pos]
            gw = a_pi[:, 2] - a_pi[:, 0]
            gh = a_pi[:, 3] - a_pi[:, 1]
            gcx = a_pi[:, 0] + 0.5 * gw
            gcy = a_pi[:, 1] + 0.5 * gh
            gw = np.clip(gw, 1.0, None)
            gh = np.clip(gh, 1.0, None)
            tdx = (gcx - acx_p) / aw_p / 0.1
            tdy = (gcy - acy_p) / ah_p / 0.1
            tdw = np.log(gw / aw_p) / 0.2
            tdh = np.log(gh / ah_p) / 0.2
            t = np.stack([tdx, tdy, tdw, tdh], axis=1)
            d = np.abs(t - reg_all[b][pos])
            rl = np.where(d <= 1.0 / 9.0, 0.5 * 9.0 * d * d, d - 0.5 / 9.0)
            reg_losses.append(rl.mean())
        else:
            reg_losses.append(0.0)
    return (np.array([np.mean(cls_losses)], np.float32),
            np.array([np.mean(reg_losses)], np.float32))


if __name__ == "__main__":
    B, A_side, C, M = 2, 8, 8, 6
    A = A_side * A_side  # 64 anchors

    # deterministic anchors: 8x8 grid of 16x16 boxes
    xs = jnp.arange(A_side, dtype=jnp.float32) * 8.0 + 4.0
    cx, cy = jnp.meshgrid(xs, xs, indexing="ij")
    cx = cx.reshape(-1)
    cy = cy.reshape(-1)
    half = 8.0
    anchors = jnp.stack([cx - half, cy - half, cx + half, cy + half], axis=1)[None]  # (1, A, 4)

    key = jax.random.PRNGKey(0)
    k1, k2 = jax.random.split(key)
    classifications = jax.random.uniform(k1, (B, A, C), jnp.float32, 0.05, 0.95)
    regressions = jax.random.normal(k2, (B, A, 4), jnp.float32) * 0.1

    # annotations: padded with class == -1
    annotations = jnp.zeros((B, M, 5), jnp.float32)
    annotations = annotations.at[:, :, 4].set(-1.0)

    def put_box(ann, b, slot, anchor_idx, cls_id, jitter):
        box = anchors[0, anchor_idx] + jnp.asarray(jitter, jnp.float32)
        ann = ann.at[b, slot, :4].set(box)
        ann = ann.at[b, slot, 4].set(float(cls_id))
        return ann

    annotations = put_box(annotations, 0, 0, 10, 2, [1.0, -1.0, 1.0, -1.0])
    annotations = put_box(annotations, 0, 1, 30, 5, [0.0, 0.0, 0.0, 0.0])
    annotations = put_box(annotations, 0, 2, 45, 0, [-1.0, 1.0, -1.0, 1.0])
    annotations = put_box(annotations, 1, 0, 5, 1, [0.0, 0.0, 0.0, 0.0])
    annotations = put_box(annotations, 1, 1, 50, 3, [1.0, 1.0, 1.0, 1.0])

    cls_loss, reg_loss = focal_loss_pallas(classifications, regressions,
                                           anchors, annotations)
    jax.block_until_ready((cls_loss, reg_loss))

    ref_cls, ref_reg = focal_loss_reference(classifications, regressions,
                                            anchors, annotations)
    np.testing.assert_allclose(np.asarray(cls_loss), ref_cls, rtol=1e-3, atol=1e-5)
    np.testing.assert_allclose(np.asarray(reg_loss), ref_reg, rtol=1e-3, atol=1e-5)

    print("KERNEL_OK")
</pallas_src>

<mosaic_0001>
module attributes {stable_mosaic.version = 11 : i64} {
  func.func @_focal_loss_kernel(%arg0: i32, %arg1: i32, %arg2: memref<16x128xf32, #tpu.memory_space<vmem>>, %arg3: memref<1x8x128xf32, #tpu.memory_space<vmem>>, %arg4: memref<1x4x128xf32, #tpu.memory_space<vmem>>, %arg5: memref<1x8x8xf32, #tpu.memory_space<vmem>>, %arg6: memref<1x1x8x128xf32, #tpu.memory_space<vmem>>) attributes {dimension_semantics = [#tpu.dimension_semantics<parallel>, #tpu.dimension_semantics<parallel>], iteration_bounds = array<i64: 2, 1>, scalar_prefetch = 0 : i64, scratch_operands = 0 : i64, tpu.core_type = #tpu.core_type<tc>, window_params = [{transform_indices = @transform_0, window_bounds = array<i64: 16, 128>}, {transform_indices = @transform_1, window_bounds = array<i64: 1, 8, 128>}, {transform_indices = @transform_2, window_bounds = array<i64: 1, 4, 128>}, {transform_indices = @transform_3, window_bounds = array<i64: 1, 8, 8>}, {transform_indices = @transform_4, window_bounds = array<i64: 1, 1, 8, 128>}]} {
    %c0 = arith.constant 0 : index
    %c0_0 = arith.constant 0 : index
    %0 = vector.load %arg2[%c0, %c0_0] : memref<16x128xf32, #tpu.memory_space<vmem>>, vector<16x128xf32>
    %c0_1 = arith.constant 0 : index
    %c0_2 = arith.constant 0 : index
    %c0_3 = arith.constant 0 : index
    %1 = vector.load %arg3[%c0_1, %c0_2, %c0_3] : memref<1x8x128xf32, #tpu.memory_space<vmem>>, vector<1x8x128xf32>
    %2 = vector.shape_cast %1 : vector<1x8x128xf32> to vector<8x128xf32>
    %c0_4 = arith.constant 0 : index
    %c0_5 = arith.constant 0 : index
    %c0_6 = arith.constant 0 : index
    %3 = vector.load %arg4[%c0_4, %c0_5, %c0_6] : memref<1x4x128xf32, #tpu.memory_space<vmem>>, vector<1x4x128xf32>
    %4 = vector.shape_cast %3 : vector<1x4x128xf32> to vector<4x128xf32>
    %c0_7 = arith.constant 0 : index
    %c0_8 = arith.constant 0 : index
    %c0_9 = arith.constant 0 : index
    %5 = vector.load %arg5[%c0_7, %c0_8, %c0_9] : memref<1x8x8xf32, #tpu.memory_space<vmem>>, vector<1x8x8xf32>
    %6 = vector.shape_cast %5 : vector<1x8x8xf32> to vector<8x8xf32>
    %7 = vector.extract_strided_slice %0 {offsets = [0, 0], sizes = [1, 128], strides = [1, 1]} : vector<16x128xf32> to vector<1x128xf32>
    %8 = vector.shape_cast %7 : vector<1x128xf32> to vector<128xf32>
    %9 = vector.extract_strided_slice %0 {offsets = [1, 0], sizes = [1, 128], strides = [1, 1]} : vector<16x128xf32> to vector<1x128xf32>
    %10 = vector.shape_cast %9 : vector<1x128xf32> to vector<128xf32>
    %11 = vector.extract_strided_slice %0 {offsets = [2, 0], sizes = [1, 128], strides = [1, 1]} : vector<16x128xf32> to vector<1x128xf32>
    %12 = vector.shape_cast %11 : vector<1x128xf32> to vector<128xf32>
    %13 = vector.extract_strided_slice %0 {offsets = [3, 0], sizes = [1, 128], strides = [1, 1]} : vector<16x128xf32> to vector<1x128xf32>
    %14 = vector.shape_cast %13 : vector<1x128xf32> to vector<128xf32>
    %15 = vector.extract_strided_slice %0 {offsets = [6, 0], sizes = [1, 128], strides = [1, 1]} : vector<16x128xf32> to vector<1x128xf32>
    %16 = vector.shape_cast %15 : vector<1x128xf32> to vector<128xf32>
    %17 = vector.extract_strided_slice %0 {offsets = [7, 0], sizes = [1, 128], strides = [1, 1]} : vector<16x128xf32> to vector<1x128xf32>
    %18 = vector.shape_cast %17 : vector<1x128xf32> to vector<128xf32>
    %19 = vector.extract_strided_slice %0 {offsets = [8, 0], sizes = [1, 128], strides = [1, 1]} : vector<16x128xf32> to vector<1x128xf32>
    %20 = vector.shape_cast %19 : vector<1x128xf32> to vector<128xf32>
    %21 = vector.extract_strided_slice %0 {offsets = [9, 0], sizes = [1, 128], strides = [1, 1]} : vector<16x128xf32> to vector<1x128xf32>
    %22 = vector.shape_cast %21 : vector<1x128xf32> to vector<128xf32>
    %23 = vector.extract_strided_slice %0 {offsets = [10, 0], sizes = [1, 128], strides = [1, 1]} : vector<16x128xf32> to vector<1x128xf32>
    %24 = vector.shape_cast %23 : vector<1x128xf32> to vector<128xf32>
    %25 = vector.extract_strided_slice %0 {offsets = [11, 0], sizes = [1, 128], strides = [1, 1]} : vector<16x128xf32> to vector<1x128xf32>
    %26 = vector.shape_cast %25 : vector<1x128xf32> to vector<128xf32>
    %27 = vector.extract_strided_slice %0 {offsets = [12, 0], sizes = [1, 128], strides = [1, 1]} : vector<16x128xf32> to vector<1x128xf32>
    %28 = vector.shape_cast %27 : vector<1x128xf32> to vector<128xf32>
    %29 = vector.extract_strided_slice %6 {offsets = [0, 0], sizes = [8, 1], strides = [1, 1]} : vector<8x8xf32> to vector<8x1xf32>
    %30 = vector.extract_strided_slice %6 {offsets = [0, 1], sizes = [8, 1], strides = [1, 1]} : vector<8x8xf32> to vector<8x1xf32>
    %31 = vector.extract_strided_slice %6 {offsets = [0, 2], sizes = [8, 1], strides = [1, 1]} : vector<8x8xf32> to vector<8x1xf32>
    %32 = vector.extract_strided_slice %6 {offsets = [0, 3], sizes = [8, 1], strides = [1, 1]} : vector<8x8xf32> to vector<8x1xf32>
    %33 = vector.extract_strided_slice %6 {offsets = [0, 4], sizes = [8, 1], strides = [1, 1]} : vector<8x8xf32> to vector<8x1xf32>
    %34 = vector.extract_strided_slice %6 {offsets = [0, 5], sizes = [8, 1], strides = [1, 1]} : vector<8x8xf32> to vector<8x1xf32>
    %cst = arith.constant 9.99999974E-5 : f32
    %cst_10 = arith.constant 0.999899983 : f32
    %35 = vector.broadcast %cst : f32 to vector<8x128xf32>
    %36 = arith.maximumf %35, %2 : vector<8x128xf32>
    %37 = vector.broadcast %cst_10 : f32 to vector<8x128xf32>
    %38 = arith.minimumf %37, %36 : vector<8x128xf32>
    %39 = vector.shape_cast %12 : vector<128xf32> to vector<1x128xf32>
    %40 = vector.broadcast %39 : vector<1x128xf32> to vector<8x128xf32>
    %41 = vector.broadcast %31 : vector<8x1xf32> to vector<8x128xf32>
    %42 = arith.minimumf %40, %41 : vector<8x128xf32>
    %43 = vector.shape_cast %8 : vector<128xf32> to vector<1x128xf32>
    %44 = vector.broadcast %43 : vector<1x128xf32> to vector<8x128xf32>
    %45 = vector.broadcast %29 : vector<8x1xf32> to vector<8x128xf32>
    %46 = arith.maximumf %44, %45 : vector<8x128xf32>
    %47 = arith.subf %42, %46 : vector<8x128xf32>
    %cst_11 = arith.constant 0.000000e+00 : f32
    %48 = vector.broadcast %cst_11 : f32 to vector<8x128xf32>
    %49 = arith.maximumf %47, %48 : vector<8x128xf32>
    %50 = vector.shape_cast %14 : vector<128xf32> to vector<1x128xf32>
    %51 = vector.broadcast %50 : vector<1x128xf32> to vector<8x128xf32>
    %52 = vector.broadcast %32 : vector<8x1xf32> to vector<8x128xf32>
    %53 = arith.minimumf %51, %52 : vector<8x128xf32>
    %54 = vector.shape_cast %10 : vector<128xf32> to vector<1x128xf32>
    %55 = vector.broadcast %54 : vector<1x128xf32> to vector<8x128xf32>
    %56 = vector.broadcast %30 : vector<8x1xf32> to vector<8x128xf32>
    %57 = arith.maximumf %55, %56 : vector<8x128xf32>
    %58 = arith.subf %53, %57 : vector<8x128xf32>
    %cst_12 = arith.constant 0.000000e+00 : f32
    %59 = vector.broadcast %cst_12 : f32 to vector<8x128xf32>
    %60 = arith.maximumf %58, %59 : vector<8x128xf32>
    %61 = arith.mulf %49, %60 : vector<8x128xf32>
    %62 = vector.shape_cast %24 : vector<128xf32> to vector<1x128xf32>
    %63 = vector.broadcast %62 : vector<1x128xf32> to vector<8x128xf32>
    %64 = vector.broadcast %34 : vector<8x1xf32> to vector<8x128xf32>
    %65 = arith.addf %63, %64 : vector<8x128xf32>
    %66 = arith.subf %65, %61 : vector<8x128xf32>
    %cst_13 = arith.constant 9.99999993E-9 : f32
    %67 = vector.broadcast %cst_13 : f32 to vector<8x128xf32>
    %68 = arith.maximumf %66, %67 : vector<8x128xf32>
    %69 = tpu.reciprocal %68 {approx = true} : vector<8x128xf32> -> vector<8x128xf32>
    %70 = arith.mulf %68, %69 : vector<8x128xf32>
    %cst_14 = arith.constant 2.000000e+00 : f32
    %71 = vector.broadcast %cst_14 : f32 to vector<8x128xf32>
    %72 = arith.subf %71, %70 : vector<8x128xf32>
    %73 = arith.mulf %69, %72 : vector<8x128xf32>
    %74 = arith.mulf %61, %73 : vector<8x128xf32>
    %cst_15 = arith.constant dense<0xFF800000> : vector<128xf32>
    %75 = vector.multi_reduction <maximumf>, %74, %cst_15 [0] : vector<8x128xf32> to vector<128xf32>
    %76 = tpu.iota {dimensions = array<i32: 0>} : vector<8x128xi32>
    %77 = vector.shape_cast %75 : vector<128xf32> to vector<1x128xf32>
    %78 = vector.broadcast %77 : vector<1x128xf32> to vector<8x128xf32>
    %79 = arith.cmpf oge, %74, %78 : vector<8x128xf32>
    %c8_i32 = arith.constant 8 : i32
    %80 = vector.broadcast %c8_i32 : i32 to vector<8x128xi32>
    %81 = arith.select %79, %76, %80 : vector<8x128xi1>, vector<8x128xi32>
    %cst_16 = arith.constant dense<2147483647> : vector<128xi32>
    %82 = vector.multi_reduction <minsi>, %81, %cst_16 [0] : vector<8x128xi32> to vector<128xi32>
    %83 = vector.shape_cast %82 : vector<128xi32> to vector<1x128xi32>
    %84 = vector.broadcast %83 : vector<1x128xi32> to vector<8x128xi32>
    %85 = arith.cmpi eq, %76, %84 : vector<8x128xi32>
    %cst_17 = arith.constant 1.000000e+00 : f32
    %cst_18 = arith.constant 0.000000e+00 : f32
    %86 = vector.broadcast %cst_17 : f32 to vector<8x128xf32>
    %87 = vector.broadcast %cst_18 : f32 to vector<8x128xf32>
    %88 = arith.select %85, %86, %87 : vector<8x128xi1>, vector<8x128xf32>
    %89 = vector.broadcast %29 : vector<8x1xf32> to vector<8x128xf32>
    %90 = arith.mulf %88, %89 : vector<8x128xf32>
    %cst_19 = arith.constant dense<0.000000e+00> : vector<128xf32>
    %91 = vector.multi_reduction <add>, %90, %cst_19 [0] : vector<8x128xf32> to vector<128xf32>
    %92 = vector.broadcast %30 : vector<8x1xf32> to vector<8x128xf32>
    %93 = arith.mulf %88, %92 : vector<8x128xf32>
    %cst_20 = arith.constant dense<0.000000e+00> : vector<128xf32>
    %94 = vector.multi_reduction <add>, %93, %cst_20 [0] : vector<8x128xf32> to vector<128xf32>
    %95 = vector.broadcast %31 : vector<8x1xf32> to vector<8x128xf32>
    %96 = arith.mulf %88, %95 : vector<8x128xf32>
    %cst_21 = arith.constant dense<0.000000e+00> : vector<128xf32>
    %97 = vector.multi_reduction <add>, %96, %cst_21 [0] : vector<8x128xf32> to vector<128xf32>
    %98 = vector.broadcast %32 : vector<8x1xf32> to vector<8x128xf32>
    %99 = arith.mulf %88, %98 : vector<8x128xf32>
    %cst_22 = arith.constant dense<0.000000e+00> : vector<128xf32>
    %100 = vector.multi_reduction <add>, %99, %cst_22 [0] : vector<8x128xf32> to vector<128xf32>
    %101 = vector.broadcast %33 : vector<8x1xf32> to vector<8x128xf32>
    %102 = arith.mulf %88, %101 : vector<8x128xf32>
    %cst_23 = arith.constant dense<0.000000e+00> : vector<128xf32>
    %103 = vector.multi_reduction <add>, %102, %cst_23 [0] : vector<8x128xf32> to vector<128xf32>
    %104 = math.roundeven %103 : vector<128xf32>
    %105 = arith.fptosi %104 : vector<128xf32> to vector<128xi32>
    %106 = tpu.iota {dimensions = array<i32: 1>} : vector<1x128xi32>
    %107 = vector.shape_cast %106 : vector<1x128xi32> to vector<128xi32>
    %c128_i32 = arith.constant 128 : i32
    %108 = arith.muli %arg1, %c128_i32 : i32
    %109 = vector.broadcast %108 : i32 to vector<128xi32>
    %110 = arith.addi %109, %107 : vector<128xi32>
    %c64_i32 = arith.constant 64 : i32
    %111 = vector.broadcast %c64_i32 : i32 to vector<128xi32>
    %112 = arith.cmpi slt, %110, %111 : vector<128xi32>
    %cst_24 = arith.constant 5.000000e-01 : f32
    %113 = vector.broadcast %cst_24 : f32 to vector<128xf32>
    %114 = arith.cmpf oge, %75, %113 : vector<128xf32>
    %115 = arith.andi %114, %112 : vector<128xi1>
    %cst_25 = arith.constant 4.000000e-01 : f32
    %116 = vector.broadcast %cst_25 : f32 to vector<128xf32>
    %117 = arith.cmpf olt, %75, %116 : vector<128xf32>
    %118 = arith.ori %115, %117 : vector<128xi1>
    %119 = arith.andi %118, %112 : vector<128xi1>
    %cst_26 = arith.constant 1.000000e+00 : f32
    %cst_27 = arith.constant 0.000000e+00 : f32
    %120 = vector.broadcast %cst_26 : f32 to vector<128xf32>
    %121 = vector.broadcast %cst_27 : f32 to vector<128xf32>
    %122 = arith.select %115, %120, %121 : vector<128xi1>, vector<128xf32>
    %123 = vector.shape_cast %122 : vector<128xf32> to vector<1x128xf32>
    %cst_28 = arith.constant dense<0.000000e+00> : vector<1xf32>
    %124 = vector.multi_reduction <add>, %123, %cst_28 [1] : vector<1x128xf32> to vector<1xf32>
    %125 = vector.shape_cast %124 : vector<1xf32> to vector<1x1xf32>
    %126 = vector.extract %125[0, 0] : f32 from vector<1x1xf32>
    %127 = tpu.iota {dimensions = array<i32: 0>} : vector<8x128xi32>
    %128 = vector.shape_cast %115 : vector<128xi1> to vector<1x128xi1>
    %129 = vector.shape_cast %105 : vector<128xi32> to vector<1x128xi32>
    %130 = vector.broadcast %129 : vector<1x128xi32> to vector<8x128xi32>
    %131 = arith.cmpi eq, %127, %130 : vector<8x128xi32>
    %132 = vector.broadcast %128 : vector<1x128xi1> to vector<8x128xi1>
    %133 = arith.andi %132, %131 : vector<8x128xi1>
    %134 = vector.shape_cast %119 : vector<128xi1> to vector<1x128xi1>
    %cst_29 = arith.constant 2.500000e-01 : f32
    %cst_30 = arith.constant 7.500000e-01 : f32
    %135 = vector.broadcast %cst_29 : f32 to vector<8x128xf32>
    %136 = vector.broadcast %cst_30 : f32 to vector<8x128xf32>
    %137 = arith.select %133, %135, %136 : vector<8x128xi1>, vector<8x128xf32>
    %cst_31 = arith.constant 1.000000e+00 : f32
    %138 = vector.broadcast %cst_31 : f32 to vector<8x128xf32>
    %139 = arith.subf %138, %38 : vector<8x128xf32>
    %140 = arith.select %133, %139, %38 : vector<8x128xi1>, vector<8x128xf32>
    %141 = arith.mulf %140, %140 : vector<8x128xf32>
    %cst_32 = arith.constant 1.000000e+00 : f32
    %142 = vector.broadcast %cst_32 : f32 to vector<8x128xf32>
    %143 = arith.subf %142, %38 : vector<8x128xf32>
    %144 = arith.select %133, %38, %143 : vector<8x128xi1>, vector<8x128xf32>
    %145 = math.log %144 : vector<8x128xf32>
    %cst_33 = arith.constant 0.000000e+00 : f32
    %146 = vector.broadcast %cst_33 : f32 to vector<8x128xf32>
    %147 = arith.subf %146, %145 : vector<8x128xf32>
    %148 = arith.mulf %137, %141 : vector<8x128xf32>
    %149 = arith.mulf %148, %147 : vector<8x128xf32>
    %cst_34 = arith.constant 0.000000e+00 : f32
    %150 = vector.shape_cast %134 : vector<1x128xi1> to vector<1x128xi1>
    %151 = vector.broadcast %150 : vector<1x128xi1> to vector<8x128xi1>
    %152 = vector.broadcast %cst_34 : f32 to vector<8x128xf32>
    %153 = arith.select %151, %149, %152 : vector<8x128xi1>, vector<8x128xf32>
    %154 = vector.shape_cast %153 : vector<8x128xf32> to vector<1x8x128xf32>
    %cst_35 = arith.constant dense<0.000000e+00> : vector<1xf32>
    %155 = vector.multi_reduction <add>, %154, %cst_35 [1, 2] : vector<1x8x128xf32> to vector<1xf32>
    %156 = vector.shape_cast %155 : vector<1xf32> to vector<1x1x1xf32>
    %157 = vector.extract %156[0, 0, 0] : f32 from vector<1x1x1xf32>
    %158 = arith.subf %97, %91 : vector<128xf32>
    %159 = arith.subf %100, %94 : vector<128xf32>
    %cst_36 = arith.constant 5.000000e-01 : f32
    %160 = vector.broadcast %cst_36 : f32 to vector<128xf32>
    %161 = arith.mulf %160, %158 : vector<128xf32>
    %162 = arith.addf %91, %161 : vector<128xf32>
    %cst_37 = arith.constant 5.000000e-01 : f32
    %163 = vector.broadcast %cst_37 : f32 to vector<128xf32>
    %164 = arith.mulf %163, %159 : vector<128xf32>
    %165 = arith.addf %94, %164 : vector<128xf32>
    %cst_38 = arith.constant 1.000000e+00 : f32
    %166 = vector.broadcast %cst_38 : f32 to vector<128xf32>
    %167 = arith.maximumf %158, %166 : vector<128xf32>
    %cst_39 = arith.constant 1.000000e+00 : f32
    %168 = vector.broadcast %cst_39 : f32 to vector<128xf32>
    %169 = arith.maximumf %159, %168 : vector<128xf32>
    %170 = arith.subf %162, %16 : vector<128xf32>
    %171 = arith.mulf %170, %20 : vector<128xf32>
    %cst_40 = arith.constant 1.000000e+01 : f32
    %172 = vector.broadcast %cst_40 : f32 to vector<128xf32>
    %173 = arith.mulf %171, %172 : vector<128xf32>
    %174 = arith.subf %165, %18 : vector<128xf32>
    %175 = arith.mulf %174, %22 : vector<128xf32>
    %cst_41 = arith.constant 1.000000e+01 : f32
    %176 = vector.broadcast %cst_41 : f32 to vector<128xf32>
    %177 = arith.mulf %175, %176 : vector<128xf32>
    %178 = math.log %167 : vector<128xf32>
    %179 = arith.subf %178, %26 : vector<128xf32>
    %cst_42 = arith.constant 5.000000e+00 : f32
    %180 = vector.broadcast %cst_42 : f32 to vector<128xf32>
    %181 = arith.mulf %179, %180 : vector<128xf32>
    %182 = math.log %169 : vector<128xf32>
    %183 = arith.subf %182, %28 : vector<128xf32>
    %cst_43 = arith.constant 5.000000e+00 : f32
    %184 = vector.broadcast %cst_43 : f32 to vector<128xf32>
    %185 = arith.mulf %183, %184 : vector<128xf32>
    %186 = vector.extract_strided_slice %4 {offsets = [0, 0], sizes = [1, 128], strides = [1, 1]} : vector<4x128xf32> to vector<1x128xf32>
    %187 = vector.shape_cast %186 : vector<1x128xf32> to vector<128xf32>
    %188 = arith.subf %173, %187 : vector<128xf32>
    %189 = math.absf %188 : vector<128xf32>
    %cst_44 = arith.constant 0.111111112 : f32
    %190 = vector.broadcast %cst_44 : f32 to vector<128xf32>
    %191 = arith.cmpf ole, %189, %190 : vector<128xf32>
    %cst_45 = arith.constant 4.500000e+00 : f32
    %192 = vector.broadcast %cst_45 : f32 to vector<128xf32>
    %193 = arith.mulf %192, %189 : vector<128xf32>
    %194 = arith.mulf %193, %189 : vector<128xf32>
    %cst_46 = arith.constant 0.055555556 : f32
    %195 = vector.broadcast %cst_46 : f32 to vector<128xf32>
    %196 = arith.subf %189, %195 : vector<128xf32>
    %197 = arith.select %191, %194, %196 : vector<128xi1>, vector<128xf32>
    %198 = vector.extract_strided_slice %4 {offsets = [1, 0], sizes = [1, 128], strides = [1, 1]} : vector<4x128xf32> to vector<1x128xf32>
    %199 = vector.shape_cast %198 : vector<1x128xf32> to vector<128xf32>
    %200 = arith.subf %177, %199 : vector<128xf32>
    %201 = math.absf %200 : vector<128xf32>
    %cst_47 = arith.constant 0.111111112 : f32
    %202 = vector.broadcast %cst_47 : f32 to vector<128xf32>
    %203 = arith.cmpf ole, %201, %202 : vector<128xf32>
    %cst_48 = arith.constant 4.500000e+00 : f32
    %204 = vector.broadcast %cst_48 : f32 to vector<128xf32>
    %205 = arith.mulf %204, %201 : vector<128xf32>
    %206 = arith.mulf %205, %201 : vector<128xf32>
    %cst_49 = arith.constant 0.055555556 : f32
    %207 = vector.broadcast %cst_49 : f32 to vector<128xf32>
    %208 = arith.subf %201, %207 : vector<128xf32>
    %209 = arith.select %203, %206, %208 : vector<128xi1>, vector<128xf32>
    %210 = arith.addf %197, %209 : vector<128xf32>
    %211 = vector.extract_strided_slice %4 {offsets = [2, 0], sizes = [1, 128], strides = [1, 1]} : vector<4x128xf32> to vector<1x128xf32>
    %212 = vector.shape_cast %211 : vector<1x128xf32> to vector<128xf32>
    %213 = arith.subf %181, %212 : vector<128xf32>
    %214 = math.absf %213 : vector<128xf32>
    %cst_50 = arith.constant 0.111111112 : f32
    %215 = vector.broadcast %cst_50 : f32 to vector<128xf32>
    %216 = arith.cmpf ole, %214, %215 : vector<128xf32>
    %cst_51 = arith.constant 4.500000e+00 : f32
    %217 = vector.broadcast %cst_51 : f32 to vector<128xf32>
    %218 = arith.mulf %217, %214 : vector<128xf32>
    %219 = arith.mulf %218, %214 : vector<128xf32>
    %cst_52 = arith.constant 0.055555556 : f32
    %220 = vector.broadcast %cst_52 : f32 to vector<128xf32>
    %221 = arith.subf %214, %220 : vector<128xf32>
    %222 = arith.select %216, %219, %221 : vector<128xi1>, vector<128xf32>
    %223 = arith.addf %210, %222 : vector<128xf32>
    %224 = vector.extract_strided_slice %4 {offsets = [3, 0], sizes = [1, 128], strides = [1, 1]} : vector<4x128xf32> to vector<1x128xf32>
    %225 = vector.shape_cast %224 : vector<1x128xf32> to vector<128xf32>
    %226 = arith.subf %185, %225 : vector<128xf32>
    %227 = math.absf %226 : vector<128xf32>
    %cst_53 = arith.constant 0.111111112 : f32
    %228 = vector.broadcast %cst_53 : f32 to vector<128xf32>
    %229 = arith.cmpf ole, %227, %228 : vector<128xf32>
    %cst_54 = arith.constant 4.500000e+00 : f32
    %230 = vector.broadcast %cst_54 : f32 to vector<128xf32>
    %231 = arith.mulf %230, %227 : vector<128xf32>
    %232 = arith.mulf %231, %227 : vector<128xf32>
    %cst_55 = arith.constant 0.055555556 : f32
    %233 = vector.broadcast %cst_55 : f32 to vector<128xf32>
    %234 = arith.subf %227, %233 : vector<128xf32>
    %235 = arith.select %229, %232, %234 : vector<128xi1>, vector<128xf32>
    %236 = arith.addf %223, %235 : vector<128xf32>
    %237 = arith.mulf %236, %122 : vector<128xf32>
    %238 = vector.shape_cast %237 : vector<128xf32> to vector<1x128xf32>
    %cst_56 = arith.constant dense<0.000000e+00> : vector<1xf32>
    %239 = vector.multi_reduction <add>, %238, %cst_56 [1] : vector<1x128xf32> to vector<1xf32>
    %240 = vector.shape_cast %239 : vector<1xf32> to vector<1x1xf32>
    %241 = vector.extract %240[0, 0] : f32 from vector<1x1xf32>
    %242 = tpu.iota {dimensions = array<i32: 3>} : vector<1x1x8x128xi32>
    %c0_i32 = arith.constant 0 : i32
    %243 = vector.broadcast %c0_i32 : i32 to vector<1x1x8x128xi32>
    %244 = arith.cmpi eq, %242, %243 : vector<1x1x8x128xi32>
    %cst_57 = arith.constant 0.000000e+00 : f32
    %245 = vector.broadcast %157 : f32 to vector<1x1x8x128xf32>
    %246 = vector.broadcast %cst_57 : f32 to vector<1x1x8x128xf32>
    %247 = arith.select %244, %245, %246 : vector<1x1x8x128xi1>, vector<1x1x8x128xf32>
    %c1_i32 = arith.constant 1 : i32
    %248 = vector.broadcast %c1_i32 : i32 to vector<1x1x8x128xi32>
    %249 = arith.cmpi eq, %242, %248 : vector<1x1x8x128xi32>
    %250 = vector.broadcast %241 : f32 to vector<1x1x8x128xf32>
    %251 = arith.select %249, %250, %247 : vector<1x1x8x128xi1>, vector<1x1x8x128xf32>
    %c2_i32 = arith.constant 2 : i32
    %252 = vector.broadcast %c2_i32 : i32 to vector<1x1x8x128xi32>
    %253 = arith.cmpi eq, %242, %252 : vector<1x1x8x128xi32>
    %254 = vector.broadcast %126 : f32 to vector<1x1x8x128xf32>
    %255 = arith.select %253, %254, %251 : vector<1x1x8x128xi1>, vector<1x1x8x128xf32>
    %c0_58 = arith.constant 0 : index
    %c0_59 = arith.constant 0 : index
    %c0_60 = arith.constant 0 : index
    %c0_61 = arith.constant 0 : index
    %256 = vector.load %arg6[%c0_58, %c0_59, %c0_60, %c0_61] : memref<1x1x8x128xf32, #tpu.memory_space<vmem>>, vector<1x1x8x128xf32>
    tpu.vector_store %arg6[%c0_58, %c0_59, %c0_60, %c0_61], %255 {strides = array<i32>} : memref<1x1x8x128xf32, #tpu.memory_space<vmem>>, vector<1x1x8x128xf32>,
    return
  }
  func.func @transform_0(%arg0: i32, %arg1: i32) -> (i32, i32) {
    %c0_i32 = arith.constant 0 : i32
    %c0_i32_0 = arith.constant 0 : i32
    return %c0_i32, %arg1 : i32, i32
  }
  func.func @transform_1(%arg0: i32, %arg1: i32) -> (i32, i32, i32) {
    %c0_i32 = arith.constant 0 : i32
    %c0_i32_0 = arith.constant 0 : i32
    return %arg0, %c0_i32, %arg1 : i32, i32, i32
  }
  func.func @transform_2(%arg0: i32, %arg1: i32) -> (i32, i32, i32) {
    %c0_i32 = arith.constant 0 : i32
    %c0_i32_0 = arith.constant 0 : i32
    return %arg0, %c0_i32, %arg1 : i32, i32, i32
  }
  func.func @transform_3(%arg0: i32, %arg1: i32) -> (i32, i32, i32) {
    %c0_i32 = arith.constant 0 : i32
    %c0_i32_0 = arith.constant 0 : i32
    %c0_i32_1 = arith.constant 0 : i32
    return %arg0, %c0_i32, %c0_i32_0 : i32, i32, i32
  }
  func.func @transform_4(%arg0: i32, %arg1: i32) -> (i32, i32, i32, i32) {
    %c0_i32 = arith.constant 0 : i32
    %c0_i32_0 = arith.constant 0 : i32
    %c0_i32_1 = arith.constant 0 : i32
    return %arg0, %arg1, %c0_i32, %c0_i32_0 : i32, i32, i32, i32
  }
}

</mosaic_0001>

<llo_original>
// kernel: tpu_custom_call.1
$region0: #{tpu_custom_call.1}
  #allocation0 [shape = 'u32[]', space=smem, size = 0x4, offset = 0x4, fixed_abs, tag = 'smem constant byte address 0x4 - core index']
  #allocation1 [shape = 'u32[72,128]{1,0:T(1,128)}', space=vmem, size = 0x9000, scoped, tag = 'internal scratch']
  %s0 = inlined_call_operand.hbm [shape: f32[16,128], index: 0, kind: input, shape index: {}]
  %s1 = inlined_call_operand.hbm [shape: f32[2,8,128], index: 1, kind: input, shape index: {}]
  %s2 = inlined_call_operand.hbm [shape: f32[2,4,128], index: 2, kind: input, shape index: {}]
  %s3 = inlined_call_operand.hbm [shape: f32[2,8,8], index: 3, kind: input, shape index: {}]
  %s4 = inlined_call_operand.hbm [shape: f32[2,1,8,128], index: 4, kind: output, shape index: {}]
  %s5 = sld [smem:[#allocation0]]
  $region65: #{tpu_custom_call.1} parent=0
    _
  %s7 = ssub.s32 1, %s5
  %s8 = scalar_select 0, %s7, %s5
  $region1: #{tpu_custom_call.1} parent=0
    #allocation2 [shape = 'u8[8192]{0}', space=vmem, size = 0x2000, scoped, tag = 'input window, operand 0, single buffered']
    #allocation3 [shape = 's32[2]{0}', space=sflag, size = 0x8, scoped, tag = 'scoped memory for tpu_custom_call.1']
    #allocation4 [shape = 's32[2]{0}', space=sflag, size = 0x8, scoped, tag = 'scoped memory for tpu_custom_call.1']
    #allocation5 [shape = 'u8[8192]{0}', space=vmem, size = 0x2000, scoped, tag = 'input window, operand 1']
    #allocation6 [shape = 's32[2]{0}', space=sflag, size = 0x8, scoped, tag = 'scoped memory for tpu_custom_call.1']
    #allocation7 [shape = 'u8[4096]{0}', space=vmem, size = 0x1000, scoped, tag = 'input window, operand 2']
    #allocation8 [shape = 'u8[8192]{0}', space=vmem, size = 0x2000, scoped, tag = 'input window, operand 3']
    #allocation9 [shape = 's32[2]{0}', space=sflag, size = 0x8, scoped, tag = 'scoped memory for tpu_custom_call.1']
    #allocation10 [shape = 'u8[8192]{0}', space=vmem, size = 0x2000, scoped, tag = 'output window, operand 0']
    %9 = vsyncpa [#allocation3], 0
    %10 = vsyncpa [#allocation6], 0
    %s11 = scalar_lea.sflag [#allocation6], 1
    %12 = vsyncpa %s11, 0
    %13 = vsyncpa [#allocation9], 0
    %s14 = scalar_lea.sflag [#allocation9], 1
    %15 = vsyncpa %s14, 0
    %16 = vsyncpa [#allocation4], 0
    %s17 = scalar_lea.sflag [#allocation4], 1
    %18 = vsyncpa %s17, 0
    loop: start=0, step=1, limit=4
    $region2: #{tpu_custom_call.1} parent=1 // loop_pre_header
      _
    $region3: #{tpu_custom_call.1} parent=1 // loop_header
      %s20 = sphi 0, %s24
      %p21 = scmp.ge.s32.totalorder %s20, 4
      %s27 = sphi 0, %s39
      %s28 = sphi 0, %s35
      %s29 = sphi 0, %s27
      %s30 = sphi 0, %s28
      %s31 = sphi 0, %s29
      %s32 = sphi 0, %s30
      %s42 = sphi 0, %s44
      %s45 = sphi 0, %s42
      %s46 = sphi 0, %s45
      %s62 = sphi 0, %s46
      %s70 = sphi 0, %s72
      %s73 = sphi 0, %s70
      %s74 = sphi 0, %s73
      %s90 = sphi 0, %s74
      %s98 = sphi 0, %s100
      %s101 = sphi 0, %s98
      %s102 = sphi 0, %s101
      %s118 = sphi 0, %s102
      %s124 = sphi 0, %s126
      %s127 = sphi 0, %s124
      %s128 = sphi 0, %s127
      %s144 = sphi 0, %s128
      %s152 = sphi 0, %s154
      %s155 = sphi 0, %s152
      %s156 = sphi 0, %s155
      %s172 = sphi 0, %s156
    $region4: #{tpu_custom_call.1} parent=1 // loop_header_branch
      %23 = sbr.rel (%p21) target = $region8
    $region5: #{tpu_custom_call.1} parent=1 // loop_body
      %s25 = ssub.s32 %s20, 1
      %s26 = ssub.s32 %s20, 2
      %s33 = sadd.s32 1, %s28
      %p34 = scmp.ge.s32.totalorder %s33, 1
      %s35 = scalar_select %p34, 0, %s33
      %s36 = sadd.s32 1, %s27
      %s37 = scalar_select %p34, %s36, %s27
      %p38 = scmp.ge.s32.totalorder %s37, 2
      %s39 = scalar_select %p38, 0, %s37
      %s40 = ssub.s32 %s28, %s35
      %p41 = scmp.eq.s32.totalorder %s40, 0
      %s43 = sadd.s32 %s42, 1
      %s44 = scalar_select %p41, %s42, %s43
      %p47 = pneg %p41
      %p48 = scmp.eq.s32.totalorder %s20, 1
      %p49 = por %p47, %p48
      %p50 = scmp.ne.s32.totalorder %s42, %s45
      %p51 = scmp.eq.s32.totalorder %s20, 0
      %p52 = por %p50, %p51
      %p53 = scmp.ne.s32.totalorder %s42, %s45
      %p54 = scmp.eq.s32.totalorder %s25, 1
      %p55 = por %p53, %p54
      %p56 = scmp.ne.s32.totalorder %s45, %s46
      %p57 = scmp.eq.s32.totalorder %s25, 0
      %p58 = por %p56, %p57
      %p59 = scmp.ne.s32.totalorder %s45, %s46
      %p60 = scmp.eq.s32.totalorder %s26, 1
      %p61 = por %p59, %p60
      %p63 = scmp.ne.s32.totalorder %s46, %s62
      %p64 = scmp.eq.s32.totalorder %s26, 0
      %p65 = por %p63, %p64
      %s66 = ssub.s32 %s27, %s39
      %s67 = ssub.s32 %s28, %s35
      %s68 = sor.u32 %s66, %s67
      %p69 = scmp.eq.s32.totalorder %s68, 0
      %s71 = sadd.s32 %s70, 1
      %s72 = scalar_select %p69, %s70, %s71
      %p75 = pneg %p69
      %p76 = scmp.eq.s32.totalorder %s20, 1
      %p77 = por %p75, %p76
      %p78 = scmp.ne.s32.totalorder %s70, %s73
      %p79 = scmp.eq.s32.totalorder %s20, 0
      %p80 = por %p78, %p79
      %p81 = scmp.ne.s32.totalorder %s70, %s73
      %p82 = scmp.eq.s32.totalorder %s25, 1
      %p83 = por %p81, %p82
      %p84 = scmp.ne.s32.totalorder %s73, %s74
      %p85 = scmp.eq.s32.totalorder %s25, 0
      %p86 = por %p84, %p85
      %p87 = scmp.ne.s32.totalorder %s73, %s74
      %p88 = scmp.eq.s32.totalorder %s26, 1
      %p89 = por %p87, %p88
      %p91 = scmp.ne.s32.totalorder %s74, %s90
      %p92 = scmp.eq.s32.totalorder %s26, 0
      %p93 = por %p91, %p92
      %s94 = ssub.s32 %s27, %s39
      %s95 = ssub.s32 %s28, %s35
      %s96 = sor.u32 %s94, %s95
      %p97 = scmp.eq.s32.totalorder %s96, 0
      %s99 = sadd.s32 %s98, 1
      %s100 = scalar_select %p97, %s98, %s99
      %p103 = pneg %p97
      %p104 = scmp.eq.s32.totalorder %s20, 1
      %p105 = por %p103, %p104
      %p106 = scmp.ne.s32.totalorder %s98, %s101
      %p107 = scmp.eq.s32.totalorder %s20, 0
      %p108 = por %p106, %p107
      %p109 = scmp.ne.s32.totalorder %s98, %s101
      %p110 = scmp.eq.s32.totalorder %s25, 1
      %p111 = por %p109, %p110
      %p112 = scmp.ne.s32.totalorder %s101, %s102
      %p113 = scmp.eq.s32.totalorder %s25, 0
      %p114 = por %p112, %p113
      %p115 = scmp.ne.s32.totalorder %s101, %s102
      %p116 = scmp.eq.s32.totalorder %s26, 1
      %p117 = por %p115, %p116
      %p119 = scmp.ne.s32.totalorder %s102, %s118
      %p120 = scmp.eq.s32.totalorder %s26, 0
      %p121 = por %p119, %p120
      %s122 = ssub.s32 %s27, %s39
      %p123 = scmp.eq.s32.totalorder %s122, 0
      %s125 = sadd.s32 %s124, 1
      %s126 = scalar_select %p123, %s124, %s125
      %p129 = pneg %p123
      %p130 = scmp.eq.s32.totalorder %s20, 1
      %p131 = por %p129, %p130
      %p132 = scmp.ne.s32.totalorder %s124, %s127
      %p133 = scmp.eq.s32.totalorder %s20, 0
      %p134 = por %p132, %p133
      %p135 = scmp.ne.s32.totalorder %s124, %s127
      %p136 = scmp.eq.s32.totalorder %s25, 1
      %p137 = por %p135, %p136
      %p138 = scmp.ne.s32.totalorder %s127, %s128
      %p139 = scmp.eq.s32.totalorder %s25, 0
      %p140 = por %p138, %p139
      %p141 = scmp.ne.s32.totalorder %s127, %s128
      %p142 = scmp.eq.s32.totalorder %s26, 1
      %p143 = por %p141, %p142
      %p145 = scmp.ne.s32.totalorder %s128, %s144
      %p146 = scmp.eq.s32.totalorder %s26, 0
      %p147 = por %p145, %p146
      %s148 = ssub.s32 %s27, %s39
      %s149 = ssub.s32 %s28, %s35
      %s150 = sor.u32 %s148, %s149
      %p151 = scmp.eq.s32.totalorder %s150, 0
      %s153 = sadd.s32 %s152, 1
      %s154 = scalar_select %p151, %s152, %s153
      %p157 = pneg %p151
      %p158 = scmp.eq.s32.totalorder %s20, 1
      %p159 = por %p157, %p158
      %p160 = scmp.ne.s32.totalorder %s152, %s155
      %p161 = scmp.eq.s32.totalorder %s20, 0
      %p162 = por %p160, %p161
      %p163 = scmp.ne.s32.totalorder %s152, %s155
      %p164 = scmp.eq.s32.totalorder %s25, 1
      %p165 = por %p163, %p164
      %p166 = scmp.ne.s32.totalorder %s155, %s156
      %p167 = scmp.eq.s32.totalorder %s25, 0
      %p168 = por %p166, %p167
      %p169 = scmp.ne.s32.totalorder %s155, %s156
      %p170 = scmp.eq.s32.totalorder %s26, 1
      %p171 = por %p169, %p170
      %p173 = scmp.ne.s32.totalorder %s156, %s172
      %p174 = scmp.eq.s32.totalorder %s26, 0
      %p175 = por %p173, %p174
      %p176 = scmp.le.s32.totalorder 1, %s20
      %p177 = scmp.lt.s32.totalorder %s20, 3
      %p178 = pnand %p176, %p177
      %p179 = pneg %p178
      // Predicated region
      $region9: #{tpu_custom_call.1} parent=5 // pred_check
        _
      $region10: #{tpu_custom_call.1} parent=5 // pred_check_branch
        %181 = sbr.rel (%p178) target = $region12
      $region11: #{tpu_custom_call.1} parent=5 // pred_region
        %s182 = ssub.s32 %s20, 1
        // Predicated region
        $region13: #{tpu_custom_call.1} parent=11 // pred_check
          %p183 = pneg %p58
        $region14: #{tpu_custom_call.1} parent=11 // pred_check_branch
          %185 = sbr.rel (%p183) target = $region16
        $region15: #{tpu_custom_call.1} parent=11 // pred_region
          %187 = vsyncadd [#allocation3], 0
          %s188 = smul.addr %s30, 8
          %s189 = scalar_lea.hbm %s0, %s188
          %s190 = sshll.u32 %s189, 4
          %s191 = int_to_ptr.hbm [resolvable:$true] %s190
          %s192 = sshll.u32 [#allocation2], 4
          %s193 = int_to_ptr.vmem [resolvable:$true] %s192
          %198 = dma.hbm_to_vmem [thread:$0]  %s191, 256, %s193, [#allocation3], 128, 128, 8
        $region16: #{tpu_custom_call.1} parent=11 // pred_fallthru
          _
      $region12: #{tpu_custom_call.1} parent=5 // pred_fallthru
        _
      %p199 = scmp.lt.s32.totalorder %s20, 2
      // Predicated region
      $region17: #{tpu_custom_call.1} parent=5 // pred_check
        %p200 = pneg %p199
      $region18: #{tpu_custom_call.1} parent=5 // pred_check_branch
        %202 = sbr.rel (%p200) target = $region20
      $region19: #{tpu_custom_call.1} parent=5 // pred_region
        // Predicated region
        $region21: #{tpu_custom_call.1} parent=19 // pred_check
          %p203 = pneg %p80
        $region22: #{tpu_custom_call.1} parent=19 // pred_check_branch
          %205 = sbr.rel (%p203) target = $region24
        $region23: #{tpu_custom_call.1} parent=19 // pred_region
          %s206 = sand.u32 %s20, 1
          %s207 = scalar_lea.sflag [#allocation6], %s206
          %s208 = sand.u32 %s70, 1
          %s209 = smul.addr %s208, 8
          %s210 = scalar_lea.vmem [#allocation5], %s209
          %212 = vsyncadd %s207, 0
          %s213 = sadd.s32 %s28, %s27
          %s214 = smul.addr %s213, 8
          %s215 = scalar_lea.hbm %s1, %s214
          %s217 = sshll.u32 %s215, 4
          %s218 = int_to_ptr.hbm [resolvable:$true] %s217
          %s219 = sshll.u32 %s210, 4
          %s220 = int_to_ptr.vmem [resolvable:$true] %s219
          %222 = dma.hbm_to_vmem [thread:$0]  %s218, 128, %s220, %s207
        $region24: #{tpu_custom_call.1} parent=19 // pred_fallthru
          _
        // Predicated region
        $region25: #{tpu_custom_call.1} parent=19 // pred_check
          %p223 = pneg %p108
        $region26: #{tpu_custom_call.1} parent=19 // pred_check_branch
          %225 = sbr.rel (%p223) target = $region28
        $region27: #{tpu_custom_call.1} parent=19 // pred_region
          %s226 = sand.u32 %s20, 1
          %s227 = scalar_lea.sflag [#allocation6], %s226
          %s228 = sand.u32 %s98, 1
          %s229 = smul.addr %s228, 4
          %s230 = scalar_lea.vmem [#allocation7], %s229
          %232 = vsyncadd %s227, 0
          %s233 = sadd.s32 %s28, %s27
          %s234 = smul.addr %s233, 4
          %s235 = scalar_lea.hbm %s2, %s234
          %s237 = sshll.u32 %s235, 4
          %s238 = int_to_ptr.hbm [resolvable:$true] %s237
          %s239 = sshll.u32 %s230, 4
          %s240 = int_to_ptr.vmem [resolvable:$true] %s239
          %242 = dma.hbm_to_vmem [thread:$0]  %s238, 64, %s240, %s227
        $region28: #{tpu_custom_call.1} parent=19 // pred_fallthru
          _
        // Predicated region
        $region29: #{tpu_custom_call.1} parent=19 // pred_check
          %p243 = pneg %p134
        $region30: #{tpu_custom_call.1} parent=19 // pred_check_branch
          %245 = sbr.rel (%p243) target = $region32
        $region31: #{tpu_custom_call.1} parent=19 // pred_region
          %s246 = sand.u32 %s124, 1
          %s247 = scalar_lea.sflag [#allocation9], %s246
          %s248 = sand.u32 %s124, 1
          %s249 = smul.addr %s248, 8
          %s250 = scalar_lea.vmem [#allocation8], %s249
          %252 = vsyncadd %s247, 0
          %s253 = smul.addr %s27, 8
          %s254 = scalar_lea.hbm %s3, %s253
          %s256 = sshll.u32 %s254, 4
          %s257 = int_to_ptr.hbm [resolvable:$true] %s256
          %s258 = sshll.u32 %s250, 4
          %s259 = int_to_ptr.vmem [resolvable:$true] %s258
          %261 = dma.hbm_to_vmem [thread:$0]  %s257, 128, %s259, %s247
        $region32: #{tpu_custom_call.1} parent=19 // pred_fallthru
          _
      $region20: #{tpu_custom_call.1} parent=5 // pred_fallthru
        _
      %p262 = scmp.le.s32.totalorder 1, %s20
      %p263 = scmp.lt.s32.totalorder %s20, 3
      %p264 = pnand %p262, %p263
      %p265 = pneg %p264
      // Predicated region
      $region33: #{tpu_custom_call.1} parent=5 // pred_check
        _
      $region34: #{tpu_custom_call.1} parent=5 // pred_check_branch
        %267 = sbr.rel (%p264) target = $region36
      $region35: #{tpu_custom_call.1} parent=5 // pred_region
        %s268 = ssub.s32 %s20, 1
        // Predicated region
        $region37: #{tpu_custom_call.1} parent=35 // pred_check
          %p269 = pneg %p58
        $region38: #{tpu_custom_call.1} parent=35 // pred_check_branch
          %271 = sbr.rel (%p269) target = $region40
        $region39: #{tpu_custom_call.1} parent=35 // pred_region
          %273 = dma.done [#allocation3], 256
        $region40: #{tpu_custom_call.1} parent=35 // pred_fallthru
          _
        %s274 = sand.u32 %s25, 1
        %s275 = scalar_lea.sflag [#allocation6], %s274
        %s276 = sand.u32 %s73, 1
        %s277 = smul.addr %s276, 8
        %s278 = scalar_lea.vmem [#allocation5], %s277
        // Predicated region
        $region41: #{tpu_custom_call.1} parent=35 // pred_check
          %p279 = pneg %p86
        $region42: #{tpu_custom_call.1} parent=35 // pred_check_branch
          %281 = sbr.rel (%p279) target = $region44
        $region43: #{tpu_custom_call.1} parent=35 // pred_region
          %283 = dma.done %s275, 128
        $region44: #{tpu_custom_call.1} parent=35 // pred_fallthru
          _
        %s284 = sand.u32 %s25, 1
        %s285 = scalar_lea.sflag [#allocation6], %s284
        %s286 = sand.u32 %s101, 1
        %s287 = smul.addr %s286, 4
        %s288 = scalar_lea.vmem [#allocation7], %s287
        // Predicated region
        $region45: #{tpu_custom_call.1} parent=35 // pred_check
          %p289 = pneg %p114
        $region46: #{tpu_custom_call.1} parent=35 // pred_check_branch
          %291 = sbr.rel (%p289) target = $region48
        $region47: #{tpu_custom_call.1} parent=35 // pred_region
          %293 = dma.done %s285, 64
        $region48: #{tpu_custom_call.1} parent=35 // pred_fallthru
          _
        %s294 = sand.u32 %s127, 1
        %s295 = scalar_lea.sflag [#allocation9], %s294
        %s296 = sand.u32 %s127, 1
        %s297 = smul.addr %s296, 8
        %s298 = scalar_lea.vmem [#allocation8], %s297
        // Predicated region
        $region49: #{tpu_custom_call.1} parent=35 // pred_check
          %p299 = pneg %p140
        $region50: #{tpu_custom_call.1} parent=35 // pred_check_branch
          %301 = sbr.rel (%p299) target = $region52
        $region51: #{tpu_custom_call.1} parent=35 // pred_region
          %303 = dma.done %s295, 128
        $region52: #{tpu_custom_call.1} parent=35 // pred_fallthru
          _
        %p304 = pneg %p58
        %p305 = pneg %p55
        %s306 = sand.u32 %s25, 1
        %s307 = scalar_lea.sflag [#allocation6], %s306
        %s308 = sand.u32 %s73, 1
        %s309 = smul.addr %s308, 8
        %s310 = scalar_lea.vmem [#allocation5], %s309
        %p311 = pneg %p86
        %p312 = pneg %p83
        %s313 = sand.u32 %s25, 1
        %s314 = scalar_lea.sflag [#allocation6], %s313
        %s315 = sand.u32 %s101, 1
        %s316 = smul.addr %s315, 4
        %s317 = scalar_lea.vmem [#allocation7], %s316
        %p318 = pneg %p114
        %p319 = pneg %p111
        %s320 = sand.u32 %s127, 1
        %s321 = scalar_lea.sflag [#allocation9], %s320
        %s322 = sand.u32 %s127, 1
        %s323 = smul.addr %s322, 8
        %s324 = scalar_lea.vmem [#allocation8], %s323
        %p325 = pneg %p140
        %p326 = pneg %p137
        %p327 = pneg %p168
        %p328 = pneg %p165
        %s329 = sand.u32 %s155, 1
        %s330 = scalar_lea.sflag [#allocation4], %s329
        %s331 = sand.u32 %s155, 1
        %s332 = smul.addr %s331, 8
        %s333 = scalar_lea.vmem [#allocation10], %s332
        %v334 = vld [vmem:[#allocation2] sm:$0xff]
        %v335 = vld [vmem:[#allocation2 + $0x8] sm:$0xff]
        %v336 = vld [vmem:[%s278] sm:$0xff]
        %v337 = vld [vmem:[%s288] sm:$0xf]
        %v338 = vld [vmem:[%s298] sm:$0xff]
        %v339 = vmax.f32 %v336, 0.0001
        %v340 = vmin.f32 %v339, 0.9999
        %v341 = vperm.slane %v334, 2
        %343 = vset.pattern.permute.xlu0 2
        %344 = vperm.xlu0 %343, %v338
        %v345 = vpop.permute.xlu0 %344
        %v347 = vmin.f32 %v341, %v345
        %v348 = vperm.slane %v334, 0
        %349 = vset.pattern.permute.xlu0 0
        %350 = vperm.xlu0 %349, %v338
        %v351 = vpop.permute.xlu0 %350
        %v353 = vmax.f32 %v348, %v351
        %v354 = vsub.f32 %v347, %v353
        %v355 = vmax.f32 %v354, 0.0
        %v356 = vperm.slane %v334, 3
        %357 = vset.pattern.permute.xlu0 3
        %358 = vperm.xlu0 %357, %v338
        %v359 = vpop.permute.xlu0 %358
        %v361 = vmin.f32 %v356, %v359
        %v362 = vperm.slane %v334, 1
        %363 = vset.pattern.permute.xlu0 1
        %364 = vperm.xlu0 %363, %v338
        %v365 = vpop.permute.xlu0 %364
        %v367 = vmax.f32 %v362, %v365
        %v368 = vsub.f32 %v361, %v367
        %v369 = vmax.f32 %v368, 0.0
        %v370 = vmul.f32 %v355, %v369
        %v371 = vperm.slane %v335, 2
        %372 = vset.pattern.permute.xlu0 5
        %373 = vperm.xlu0 %372, %v338
        %v374 = vpop.permute.xlu0 %373
        %v376 = vadd.f32 %v371, %v374
        %v377 = vsub.f32 %v376, %v370
        %v378 = vmax.f32 %v377, 1e-08
        %v379 = vrcp.pop %v378
        %v380 = vmul.f32 %v378, %v379
        %v381 = vsub.f32 2.0, %v380
        %v382 = vmul.f32 %v379, %v381
        %v383 = vmul.f32 %v370, %v382
        %v384 = vrot.slane %v383, 4
        %v385 = vmax.f32 %v383, %v384
        %v386 = vrot.slane %v385, 2
        %v387 = vmax.f32 %v385, %v386
        %v388 = vrot.slane %v387, 1
        %v389 = vmax.f32 %v387, %v388
        %v390 = vlaneseq
        %v391 = vshrl.u32 %v390, 7
        %vm392 = vcmp.ge.f32.partialorder %v383, %v389
        %v393 = vsel %vm392, %v391, 8
        %v394 = vrot.slane %v393, 4
        %vm395 = vcmp.lt.s32.totalorder %v393, %v394
        %v396 = vsel %vm395, %v393, %v394
        %v397 = vrot.slane %v396, 2
        %vm398 = vcmp.lt.s32.totalorder %v396, %v397
        %v399 = vsel %vm398, %v396, %v397
        %v400 = vrot.slane %v399, 1
        %vm401 = vcmp.lt.s32.totalorder %v399, %v400
        %v402 = vsel %vm401, %v399, %v400
        %vm403 = vcmp.eq.s32.totalorder %v391, %v402
        %v404 = vsel %vm403, 1.0, 0.0
        %v405 = vmul.f32 %v404, %v351
        %v406 = vrot.slane %v405, 4
        %v407 = vadd.f32 %v405, %v406
        %v408 = vrot.slane %v407, 2
        %v409 = vadd.f32 %v407, %v408
        %v410 = vrot.slane %v409, 1
        %v411 = vadd.f32 %v409, %v410
        %v412 = vmul.f32 %v404, %v365
        %v413 = vrot.slane %v412, 4
        %v414 = vadd.f32 %v412, %v413
        %v415 = vrot.slane %v414, 2
        %v416 = vadd.f32 %v414, %v415
        %v417 = vrot.slane %v416, 1
        %v418 = vadd.f32 %v416, %v417
        %v419 = vmul.f32 %v404, %v345
        %v420 = vrot.slane %v419, 4
        %v421 = vadd.f32 %v419, %v420
        %v422 = vrot.slane %v421, 2
        %v423 = vadd.f32 %v421, %v422
        %v424 = vrot.slane %v423, 1
        %v425 = vadd.f32 %v423, %v424
        %v426 = vmul.f32 %v404, %v359
        %v427 = vrot.slane %v426, 4
        %v428 = vadd.f32 %v426, %v427
        %v429 = vrot.slane %v428, 2
        %v430 = vadd.f32 %v428, %v429
        %v431 = vrot.slane %v430, 1
        %v432 = vadd.f32 %v430, %v431
        %433 = vset.pattern.permute.xlu0 4
        %434 = vperm.xlu0 %433, %v338
        %v435 = vpop.permute.xlu0 %434
        %v437 = vmul.f32 %v404, %v435
        %v438 = vrot.slane %v437, 4
        %v439 = vadd.f32 %v437, %v438
        %v440 = vrot.slane %v439, 2
        %v441 = vadd.f32 %v439, %v440
        %v442 = vrot.slane %v441, 1
        %v443 = vadd.f32 %v441, %v442
        %v444 = vcvt.f32.s32.ties.to.even %v443
        %v445 = vlaneseq
        %v446 = vand.u32 %v445, 127
        %s447 = smul.u32 %s30, 128
        %v448 = vstv %s447
        %v449 = vadd.s32 %v448, %v446
        %vm450 = vcmp.lt.s32.totalorder %v449, 64
        %vm451 = vcmp.ge.f32.partialorder %v389, 0.5
        %vm452 = vmand %vm451, %vm450
        %vm453 = vcmp.lt.f32.partialorder %v389, 0.4
        %vm454 = vmor %vm452, %vm453
        %vm455 = vmand %vm454, %vm450
        %v456 = vsel %vm452, 1.0, 0.0
        %457 = vadd.xlane.f32.xlu0 %v456
        %v458 = vpop.xlane.xlu0 %457
        %s459 = vtos %v458
        %vm460 = vcmp.eq.s32.totalorder %v391, %v444
        %v461 = vsel %vm452, 1, 0
        %vm462 = vcmp.eq.s32.totalorder %v461, 1
        %v463 = vsel %vm460, 1, 0
        %v464 = vrot.slane %v463, 1
        %v465 = vrot.slane %v463, 2
        %v466 = vrot.slane %v463, 3
        %v467 = vrot.slane %v463, 4
        %v468 = vrot.slane %v463, 5
        %v469 = vrot.slane %v463, 6
        %v470 = vrot.slane %v463, 7
        %vm471 = vcmp.ne.s32.totalorder %v463, 0
        %vm472 = vcmp.ne.s32.totalorder %v464, 0
        %vm473 = vcmp.ne.s32.totalorder %v465, 0
        %vm474 = vcmp.ne.s32.totalorder %v466, 0
        %vm475 = vcmp.ne.s32.totalorder %v467, 0
        %vm476 = vcmp.ne.s32.totalorder %v468, 0
        %vm477 = vcmp.ne.s32.totalorder %v469, 0
        %vm478 = vcmp.ne.s32.totalorder %v470, 0
        %vm479 = vmand %vm462, %vm471
        %vm480 = vmand %vm462, %vm472
        %vm481 = vmand %vm462, %vm473
        %vm482 = vmand %vm462, %vm474
        %vm483 = vmand %vm462, %vm475
        %vm484 = vmand %vm462, %vm476
        %vm485 = vmand %vm462, %vm477
        %vm486 = vmand %vm462, %vm478
        %v487 = vsel %vm479, 0.25, 0.75
        %v488 = vsel %vm480, 0.25, 0.75
        %v489 = vsel %vm481, 0.25, 0.75
        %v490 = vsel %vm482, 0.25, 0.75
        %v491 = vsel %vm483, 0.25, 0.75
        %v492 = vsel %vm484, 0.25, 0.75
        %v493 = vsel %vm485, 0.25, 0.75
        %v494 = vsel %vm486, 0.25, 0.75
        %v495 = vsub.f32 1.0, %v340
        %v497 = vrot.slane %v495, 1
        %v498 = vrot.slane %v495, 2
        %v499 = vrot.slane %v495, 3
        %v500 = vrot.slane %v495, 4
        %v501 = vrot.slane %v495, 5
        %v502 = vrot.slane %v495, 6
        %v503 = vrot.slane %v495, 7
        %v513 = vrot.slane %v340, 1
        %v514 = vrot.slane %v340, 2
        %v515 = vrot.slane %v340, 3
        %v516 = vrot.slane %v340, 4
        %v517 = vrot.slane %v340, 5
        %v518 = vrot.slane %v340, 6
        %v519 = vrot.slane %v340, 7
        %v528 = vsel %vm479, %v495, %v340
        %v529 = vsel %vm480, %v497, %v513
        %v530 = vsel %vm481, %v498, %v514
        %v531 = vsel %vm482, %v499, %v515
        %v532 = vsel %vm483, %v500, %v516
        %v533 = vsel %vm484, %v501, %v517
        %v534 = vsel %vm485, %v502, %v518
        %v535 = vsel %vm486, %v503, %v519
        %v536 = vmul.f32 %v528, %v528
        %v537 = vmul.f32 %v529, %v529
        %v538 = vmul.f32 %v530, %v530
        %v539 = vmul.f32 %v531, %v531
        %v540 = vmul.f32 %v532, %v532
        %v541 = vmul.f32 %v533, %v533
        %v542 = vmul.f32 %v534, %v534
        %v543 = vmul.f32 %v535, %v535
        %v544 = vsel %vm479, %v340, %v495
        %v545 = vsel %vm480, %v513, %v497
        %v546 = vsel %vm481, %v514, %v498
        %v547 = vsel %vm482, %v515, %v499
        %v548 = vsel %vm483, %v516, %v500
        %v549 = vsel %vm484, %v517, %v501
        %v550 = vsel %vm485, %v518, %v502
        %v551 = vsel %vm486, %v519, %v503
        %v552 = vlog2.pop %v544
        %v553 = vmul.f32 %v552, 0.6931472
        %v554 = vlog2.pop %v545
        %v555 = vmul.f32 %v554, 0.6931472
        %v556 = vlog2.pop %v546
        %v557 = vmul.f32 %v556, 0.6931472
        %v558 = vlog2.pop %v547
        %v559 = vmul.f32 %v558, 0.6931472
        %v560 = vlog2.pop %v548
        %v561 = vmul.f32 %v560, 0.6931472
        %v562 = vlog2.pop %v549
        %v563 = vmul.f32 %v562, 0.6931472
        %v564 = vlog2.pop %v550
        %v565 = vmul.f32 %v564, 0.6931472
        %v566 = vlog2.pop %v551
        %v567 = vmul.f32 %v566, 0.6931472
        %v568 = vsub.f32 0.0, %v553
        %v569 = vsub.f32 0.0, %v555
        %v570 = vsub.f32 0.0, %v557
        %v571 = vsub.f32 0.0, %v559
        %v572 = vsub.f32 0.0, %v561
        %v573 = vsub.f32 0.0, %v563
        %v574 = vsub.f32 0.0, %v565
        %v575 = vsub.f32 0.0, %v567
        %v576 = vmul.f32 %v487, %v536
        %v577 = vmul.f32 %v488, %v537
        %v578 = vmul.f32 %v489, %v538
        %v579 = vmul.f32 %v490, %v539
        %v580 = vmul.f32 %v491, %v540
        %v581 = vmul.f32 %v492, %v541
        %v582 = vmul.f32 %v493, %v542
        %v583 = vmul.f32 %v494, %v543
        %v584 = vmul.f32 %v576, %v568
        %v585 = vmul.f32 %v577, %v569
        %v586 = vmul.f32 %v578, %v570
        %v587 = vmul.f32 %v579, %v571
        %v588 = vmul.f32 %v580, %v572
        %v589 = vmul.f32 %v581, %v573
        %v590 = vmul.f32 %v582, %v574
        %v591 = vmul.f32 %v583, %v575
        %v592 = vsel %vm455, 1, 0
        %vm593 = vcmp.eq.s32.totalorder %v592, 1
        %v594 = vsel %vm593, %v584, 0.0
        %v595 = vsel %vm593, %v585, 0.0
        %v596 = vsel %vm593, %v586, 0.0
        %v597 = vsel %vm593, %v587, 0.0
        %v598 = vsel %vm593, %v588, 0.0
        %v599 = vsel %vm593, %v589, 0.0
        %v600 = vsel %vm593, %v590, 0.0
        %v601 = vsel %vm593, %v591, 0.0
        %v610 = vrot.slane %v595, 7
        %vm611 = vcmask 1041409
        %v612 = vsel %vm611, %v610, %v594
        %v613 = vrot.slane %v596, 6
        %vm614 = vcmask 1042434
        %v615 = vsel %vm614, %v613, %v612
        %v616 = vrot.slane %v597, 5
        %vm617 = vcmask 1043459
        %v618 = vsel %vm617, %v616, %v615
        %v619 = vrot.slane %v598, 4
        %vm620 = vcmask 1044484
        %v621 = vsel %vm620, %v619, %v618
        %v622 = vrot.slane %v599, 3
        %vm623 = vcmask 1045509
        %v624 = vsel %vm623, %v622, %v621
        %v625 = vrot.slane %v600, 2
        %vm626 = vcmask 1046534
        %v627 = vsel %vm626, %v625, %v624
        %v628 = vrot.slane %v601, 1
        %vm629 = vcmask 1047559
        %v630 = vsel %vm629, %v628, %v627
        %632 = vadd.xlane.f32.xlu0 %v630
        %v633 = vpop.xlane.xlu0 %632
        %v634 = vrot.slane %v633, 4
        %v635 = vadd.f32 %v633, %v634
        %v636 = vrot.slane %v635, 2
        %v637 = vadd.f32 %v635, %v636
        %v638 = vrot.slane %v637, 1
        %v639 = vadd.f32 %v637, %v638
        %s640 = vtos %v639
        %v641 = vsub.f32 %v425, %v411
        %v642 = vsub.f32 %v432, %v418
        %v643 = vmul.f32 %v641, 0.5
        %v644 = vadd.f32 %v411, %v643
        %v645 = vmul.f32 %v642, 0.5
        %v646 = vadd.f32 %v418, %v645
        %v647 = vmax.f32 %v641, 1.0
        %v648 = vmax.f32 %v642, 1.0
        %v649 = vsub.f32 %v644, %v334
        %v651 = vrot.slane %v335, 2
        %v653 = vmul.f32 %v649, %v651
        %v654 = vmul.f32 %v653, 10.0
        %v655 = vsub.f32 %v646, %v334
        %v656 = vmul.f32 %v655, %v651
        %v657 = vmul.f32 %v656, 10.0
        %v658 = vlog2.pop %v647
        %v659 = vmul.f32 %v658, 0.6931472
        %v660 = vsub.f32 %v659, %v335
        %v661 = vmul.f32 %v660, 5.0
        %v662 = vlog2.pop %v648
        %v663 = vmul.f32 %v662, 0.6931472
        %v664 = vsub.f32 %v663, %v335
        %v665 = vmul.f32 %v664, 5.0
        %v667 = vrot.slane %v337, 2
        %v669 = vsub.f32 %v654, %v667
        %v670 = vand.u32 2147483647, %v669
        %vm671 = vcmp.le.f32.partialorder %v670, 0.11111111
        %v672 = vmul.f32 %v670, 4.5
        %v673 = vmul.f32 %v672, %v670
        %v674 = vsub.f32 %v670, 0.055555556
        %v675 = vsel %vm671, %v673, %v674
        %v676 = vsub.f32 %v657, %v667
        %v677 = vand.u32 2147483647, %v676
        %vm678 = vcmp.le.f32.partialorder %v677, 0.11111111
        %v679 = vmul.f32 %v677, 4.5
        %v680 = vmul.f32 %v679, %v677
        %v681 = vsub.f32 %v677, 0.055555556
        %v682 = vsel %vm678, %v680, %v681
        %v684 = vrot.slane %v682, 1
        %v686 = vadd.f32 %v675, %v684
        %v687 = vrot.slane %v337, 7
        %v689 = vsub.f32 %v661, %v687
        %v690 = vand.u32 2147483647, %v689
        %vm691 = vcmp.le.f32.partialorder %v690, 0.11111111
        %v692 = vmul.f32 %v690, 4.5
        %v693 = vmul.f32 %v692, %v690
        %v694 = vsub.f32 %v690, 0.055555556
        %v695 = vsel %vm691, %v693, %v694
        %v697 = vrot.slane %v695, 5
        %v699 = vadd.f32 %v686, %v697
        %v700 = vsub.f32 %v665, %v687
        %v701 = vand.u32 2147483647, %v700
        %vm702 = vcmp.le.f32.partialorder %v701, 0.11111111
        %v703 = vmul.f32 %v701, 4.5
        %v704 = vmul.f32 %v703, %v701
        %v705 = vsub.f32 %v701, 0.055555556
        %v706 = vsel %vm702, %v704, %v705
        %v708 = vrot.slane %v706, 6
        %v710 = vadd.f32 %v699, %v708
        %v711 = vmul.f32 %v710, %v456
        %v712 = vsel %vm626, %v711, 0.0
        %713 = vadd.xlane.f32.xlu0 %v712
        %v714 = vpop.xlane.xlu0 %713
        %v716 = vrot.slane %v714, 6
        %s718 = vtos %v716
        %vm719 = vcmp.eq.s32.totalorder %v446, 0
        %v720 = vstv %s640
        %v721 = vsel %vm719, %v720, 0.0
        %vm722 = vcmp.eq.s32.totalorder %v446, 1
        %v723 = vstv %s718
        %v724 = vsel %vm722, %v723, %v721
        %vm725 = vcmp.eq.s32.totalorder %v446, 2
        %v726 = vstv %s459
        %v727 = vsel %vm725, %v726, %v724
        %728 = vst [vmem:[%s333] sm:$0xff] %v727
        %s729 = sand.u32 %s155, 1
        %s730 = scalar_lea.sflag [#allocation4], %s729
        %s731 = sand.u32 %s155, 1
        %s732 = smul.addr %s731, 8
        %s733 = scalar_lea.vmem [#allocation10], %s732
        // Predicated region
        $region53: #{tpu_custom_call.1} parent=35 // pred_check
          %p734 = pneg %p165
        $region54: #{tpu_custom_call.1} parent=35 // pred_check_branch
          %736 = sbr.rel (%p734) target = $region56
        $region55: #{tpu_custom_call.1} parent=35 // pred_region
          %738 = vsyncadd %s730, 0
          %s739 = sadd.s32 %s30, %s29
          %s740 = smul.addr %s739, 8
          %s741 = scalar_lea.hbm %s4, %s740
          %s743 = sshll.u32 %s733, 4
          %s744 = int_to_ptr.vmem [resolvable:$true] %s743
          %s745 = sshll.u32 %s741, 4
          %s746 = int_to_ptr.hbm [resolvable:$true] %s745
          %748 = dma.vmem_to_hbm [thread:$0]  %s744, 128, %s746, %s730
        $region56: #{tpu_custom_call.1} parent=35 // pred_fallthru
          _
      $region36: #{tpu_custom_call.1} parent=5 // pred_fallthru
        _
      %p749 = scmp.le.s32.totalorder 2, %s20
      // Predicated region
      $region57: #{tpu_custom_call.1} parent=5 // pred_check
        %p750 = pneg %p749
      $region58: #{tpu_custom_call.1} parent=5 // pred_check_branch
        %752 = sbr.rel (%p750) target = $region60
      $region59: #{tpu_custom_call.1} parent=5 // pred_region
        %s753 = ssub.s32 %s20, 2
        // Predicated region
        $region61: #{tpu_custom_call.1} parent=59 // pred_check
          %p754 = pneg %p171
        $region62: #{tpu_custom_call.1} parent=59 // pred_check_branch
          %756 = sbr.rel (%p754) target = $region64
        $region63: #{tpu_custom_call.1} parent=59 // pred_region
          %s757 = sand.u32 %s156, 1
          %s758 = scalar_lea.sflag [#allocation4], %s757
          %s759 = sand.u32 %s156, 1
          %s760 = smul.addr %s759, 8
          %s761 = scalar_lea.vmem [#allocation10], %s760
          %763 = dma.done %s758, 128
        $region64: #{tpu_custom_call.1} parent=59 // pred_fallthru
          _
      $region60: #{tpu_custom_call.1} parent=5 // pred_fallthru
        _
    $region6: #{tpu_custom_call.1} parent=1 // loop_footer
      %s24 = sadd.s32 1, %s20
    $region7: #{tpu_custom_call.1} parent=1 // loop_footer_branch
      %19 = sbr.rel target = $region3
    $region8: #{tpu_custom_call.1} parent=1 // loop_exit
      _
    %764 = vsyncpa [#allocation3], 1
    %s765 = scalar_lea.sflag [#allocation3], 1
    %766 = vsyncpa %s765, 1
    %767 = vsyncpa [#allocation6], 1
    %s768 = scalar_lea.sflag [#allocation6], 1
    %769 = vsyncpa %s768, 1
    %770 = vsyncpa [#allocation9], 1
    %s771 = scalar_lea.sflag [#allocation9], 1
    %772 = vsyncpa %s771, 1
    %773 = vsyncpa [#allocation4], 1
    %s774 = scalar_lea.sflag [#allocation4], 1
    %775 = vsyncpa %s774, 1

</llo_original>
